<compile_context>
chip_gen: v7x
topology: tpu7x:2x2x1
jax: 0.10.0
libtpu: 0.0.40
codegen_flags: <defaults>
</compile_context>

<pallas_src>
import functools

import jax
import jax.numpy as jnp
from jax.experimental import pallas as pl
from jax.experimental.pallas import tpu as pltpu


def _round_up(x, m):
    return ((x + m - 1) // m) * m


# ---------------------------------------------------------------------------
# Pallas kernel: tiled bf16 GEMM (f32 MXU accumulation) + folded-BN bias + ReLU6
# ---------------------------------------------------------------------------
def _convbn_kernel(p_ref, w_ref, bias_ref, o_ref, acc_ref):
    # p_ref:    (TM, TK)   bf16 im2col patch rows
    # w_ref:    (TK, TN)   bf16 conv weight with folded BN scale
    # bias_ref: (1, TN)    f32 folded BN bias
    # o_ref:    (TM, TN)   bf16 output tile
    # acc_ref:  (TM, TN)   f32 accumulator scratch (resident across the K grid axis)
    k = pl.program_id(2)

    @pl.when(k == 0)
    def _init():
        acc_ref[...] = jnp.zeros_like(acc_ref)

    acc_ref[...] += jnp.dot(p_ref[...], w_ref[...],
                            preferred_element_type=jnp.float32)

    @pl.when(k == pl.num_programs(2) - 1)
    def _finalize():
        y = acc_ref[...] + bias_ref[...]            # folded BN bias, f32
        y = jnp.minimum(jnp.maximum(y, 0.0), 6.0)   # ReLU6, f32
        o_ref[...] = y.astype(o_ref.dtype)          # store bf16


def _select_tiles(m, kdim, cout_pad):
    """Pick (tm, tk, tn, kdim_pad, vmem_limit_bytes) from an explicit VMEM demand model."""
    WEIGHT_RESIDENT_BYTES = 6 << 20   # keep the whole folded bf16 weight resident below this
    K_SLAB_BYTES = 4 << 20            # per-buffer cap on the streamed patch K-slab
    VMEM_BUDGET = 32 << 20            # conservative: safe on v7x (64 MiB physical VMEM)

    kdim16 = _round_up(kdim, 16)      # bf16 sublane packing multiple; don't over-pad to 128

    # Cout tile: resident weight when it fits, else match the MXU width.
    if kdim16 * cout_pad * 2 <= WEIGHT_RESIDENT_BYTES:
        tn = cout_pad
    elif cout_pad % 256 == 0:
        tn = 256
    else:
        tn = 128

    def demand(tm, tk):
        patch = 2 * tm * tk * 2       # double-buffered bf16 patches
        wgt = 2 * tk * tn * 2         # double-buffered bf16 weight
        bias = 2 * tn * 4
        outb = 2 * tm * tn * 2        # double-buffered bf16 output
        acc = tm * tn * 4             # f32 accumulator scratch
        return patch + wgt + bias + outb + acc

    tm = tk = kdim_pad = None
    for cand in (1024, 512, 256, 128, 64, 32, 16, 8):
        if cand * kdim16 * 2 <= K_SLAB_BYTES:
            tk_c, kdp_c = kdim16, kdim16                     # no K tiling needed
        else:
            tk_c = max(128, (K_SLAB_BYTES // (cand * 2)) // 128 * 128)
            kdp_c = tk_c * ((kdim + tk_c - 1) // tk_c)       # K grid axis, multiple of tk
        if demand(cand, tk_c) <= VMEM_BUDGET:
            tm, tk, kdim_pad = cand, tk_c, kdp_c
            break
    if tm is None:  # pathological shapes; smallest safe tile
        tm, tk = 8, 128
        kdim_pad = _round_up(kdim, tk)

    # Don't make the row tile larger than the (8-aligned) problem ...
    tm = min(tm, _round_up(m, 8))
    # ... and keep >= 2 row tiles when possible so megacore / v7x's 2 TCs both get work.
    if m <= tm and m >= 16:
        tm = _round_up((m + 1) // 2, 8)

    vmem_limit = int(max(demand(tm, tk) + (8 << 20), 32 << 20))
    return tm, tk, tn, kdim_pad, vmem_limit


def _im2col_nhwc(x_nhwc, kh, kw, stride, padding):
    # Plain-JAX glue: build (N, OH, OW, KH*KW*Cin) patches, ordering (kh, kw, cin).
    n, h, w, c = x_nhwc.shape
    x_pad = jnp.pad(x_nhwc, ((0, 0), (padding, padding), (padding, padding), (0, 0)))
    oh = (h + 2 * padding - kh) // stride + 1
    ow = (w + 2 * padding - kw) // stride + 1
    cols = []
    for i in range(kh):
        for j in range(kw):
            cols.append(x_pad[:, i:i + stride * oh:stride, j:j + stride * ow:stride, :])
    return jnp.concatenate(cols, axis=-1), oh, ow


@functools.partial(jax.jit, static_argnames=("stride", "padding"))
def conv_bn_relu6(x_nchw, weight_oihw, bn_gamma, bn_beta, bn_mean, bn_var,
                  stride=1, padding=1, eps=1e-5):
    """ConvBN forward. x_nchw: (N, Cin, H, W); weight_oihw: (Cout, Cin, KH, KW)."""
    cout, cin, kh, kw = weight_oihw.shape
    n = x_nchw.shape[0]

    # --- glue: layout + im2col + BN folding (plain JAX) ---
    x_nhwc = jnp.transpose(x_nchw, (0, 2, 3, 1)).astype(jnp.bfloat16)   # NCHW -> NHWC, bf16
    patches, oh, ow = _im2col_nhwc(x_nhwc, kh, kw, stride, padding)
    m = n * oh * ow
    kdim = kh * kw * cin

    cout_pad = _round_up(cout, 128)
    tm, tk, tn, kdim_pad, vmem_limit = _select_tiles(m, kdim, cout_pad)

    patches2d = patches.reshape(m, kdim)
    patches2d = jnp.pad(patches2d, ((0, 0), (0, kdim_pad - kdim)))       # no row padding

    # Weight (Cout,Cin,KH,KW) -> (KH*KW*Cin, Cout); fold BN scale in f32, cast bf16, pad.
    w2d = jnp.transpose(weight_oihw, (2, 3, 1, 0)).reshape(kdim, cout).astype(jnp.float32)
    scale = (bn_gamma / jnp.sqrt(bn_var + eps)).astype(jnp.float32)      # (Cout,)
    bias = bn_beta.astype(jnp.float32) - bn_mean.astype(jnp.float32) * scale
    w2d = (w2d * scale[None, :]).astype(jnp.bfloat16)
    w2d = jnp.pad(w2d, ((0, kdim_pad - kdim), (0, cout_pad - cout)))
    bias_pad = jnp.pad(bias.reshape(1, cout), ((0, 0), (0, cout_pad - cout)))

    # --- Pallas hot path: tiled bf16 GEMM (f32 acc) + bias + ReLU6, bf16 output ---
    grid = (pl.cdiv(m, tm), cout_pad // tn, kdim_pad // tk)
    out2d = pl.pallas_call(
        _convbn_kernel,
        out_shape=jax.ShapeDtypeStruct((m, cout_pad), jnp.bfloat16),
        grid_spec=pltpu.PrefetchScalarGridSpec(
            num_scalar_prefetch=0,
            grid=grid,
            in_specs=[
                pl.BlockSpec((tm, tk), lambda i, j, k: (i, k)),
                pl.BlockSpec((tk, tn), lambda i, j, k: (k, j)),
                pl.BlockSpec((1, tn), lambda i, j, k: (0, j)),
            ],
            out_specs=pl.BlockSpec((tm, tn), lambda i, j, k: (i, j)),
            scratch_shapes=[pltpu.VMEM((tm, tn), jnp.float32)],
        ),
        compiler_params=pltpu.CompilerParams(
            dimension_semantics=("parallel", "parallel", "arbitrary"),
            vmem_limit_bytes=vmem_limit,
        ),
    )(patches2d, w2d, bias_pad)

    out_nhwc = out2d[:, :cout].reshape(n, oh, ow, cout)
    # NHWC -> NCHW; cast back to the input dtype fuses into the transpose pass.
    return jnp.transpose(out_nhwc, (0, 3, 1, 2)).astype(x_nchw.dtype)


if __name__ == "__main__":
    # Small shapes consistent with the module: N=2, Cin=4, H=W=16, Cout=8, 3x3, pad=1.
    key = jax.random.PRNGKey(0)
    k_x, k_w, k_g, k_b, k_m, k_v = jax.random.split(key, 6)

    N, CIN, H, W = 2, 4, 16, 16
    COUT, KH, KW = 8, 3, 3

    x = jax.random.normal(k_x, (N, CIN, H, W), dtype=jnp.float32)
    weight = jax.random.normal(k_w, (COUT, CIN, KH, KW), dtype=jnp.float32) * 0.1
    gamma = 1.0 + 0.1 * jax.random.normal(k_g, (COUT,), dtype=jnp.float32)
    beta = 0.1 * jax.random.normal(k_b, (COUT,), dtype=jnp.float32)
    running_mean = 0.1 * jax.random.normal(k_m, (COUT,), dtype=jnp.float32)
    running_var = jnp.abs(1.0 + 0.1 * jax.random.normal(k_v, (COUT,), dtype=jnp.float32))

    out = conv_bn_relu6(x, weight, gamma, beta, running_mean, running_var,
                        stride=1, padding=1)
    jax.block_until_ready(out)
    assert out.shape == (N, COUT, H, W), out.shape
    assert out.dtype == jnp.float32, out.dtype

    # Pure-JAX f32 reference (folded inference BN + ReLU6); loose tol for bf16 operands/output.
    ref = jax.lax.conv_general_dilated(
        x, weight, window_strides=(1, 1), padding=((1, 1), (1, 1)),
        dimension_numbers=("NCHW", "OIHW", "NCHW"))
    r_scale = gamma / jnp.sqrt(running_var + 1e-5)
    r_bias = beta - running_mean * r_scale
    ref = ref * r_scale[None, :, None, None] + r_bias[None, :, None, None]
    ref = jnp.clip(ref, 0.0, 6.0)
    max_err = float(jnp.max(jnp.abs(out - ref)))
    assert max_err < 1e-1, f"max abs err {max_err}"

    print("KERNEL_OK")
</pallas_src>

<mosaic_0001>
module attributes {stable_mosaic.version = 11 : i64} {
  func.func @_convbn_kernel(%arg0: i32, %arg1: i32, %arg2: i32, %arg3: memref<256x48xbf16, #tpu.memory_space<vmem>>, %arg4: memref<48x128xbf16, #tpu.memory_space<vmem>>, %arg5: memref<1x128xf32, #tpu.memory_space<vmem>>, %arg6: memref<256x128xbf16, #tpu.memory_space<vmem>>, %arg7: memref<256x128xf32, #tpu.memory_space<vmem>>) attributes {dimension_semantics = [#tpu.dimension_semantics<parallel>, #tpu.dimension_semantics<parallel>, #tpu.dimension_semantics<arbitrary>], iteration_bounds = array<i64: 2, 1, 1>, scalar_prefetch = 0 : i64, scratch_operands = 1 : i64, tpu.core_type = #tpu.core_type<tc>, window_params = [{transform_indices = @transform_0, window_bounds = array<i64: 256, 48>}, {transform_indices = @transform_1, window_bounds = array<i64: 48, 128>}, {transform_indices = @transform_2, window_bounds = array<i64: 1, 128>}, {transform_indices = @transform_3, window_bounds = array<i64: 256, 128>}]} {
    %c0_i32 = arith.constant 0 : i32
    %0 = arith.cmpi eq, %arg2, %c0_i32 : i32
    %1 = arith.extui %0 : i1 to i32
    %c0_i32_0 = arith.constant 0 : i32
    %2 = arith.cmpi ne, %1, %c0_i32_0 : i32
    scf.if %2 {
      %cst_10 = arith.constant 0.000000e+00 : f32
      %12 = vector.broadcast %cst_10 : f32 to vector<256x128xf32>
      %c0_11 = arith.constant 0 : index
      %c0_12 = arith.constant 0 : index
      %13 = vector.load %arg7[%c0_11, %c0_12] : memref<256x128xf32, #tpu.memory_space<vmem>>, vector<256x128xf32>
      tpu.vector_store %arg7[%c0_11, %c0_12], %12 {strides = array<i32>} : memref<256x128xf32, #tpu.memory_space<vmem>>, vector<256x128xf32>,
    } else {
    }
    %c0 = arith.constant 0 : index
    %c0_1 = arith.constant 0 : index
    %3 = vector.load %arg7[%c0, %c0_1] : memref<256x128xf32, #tpu.memory_space<vmem>>, vector<256x128xf32>
    %c0_2 = arith.constant 0 : index
    %c0_3 = arith.constant 0 : index
    %4 = vector.load %arg3[%c0_2, %c0_3] : memref<256x48xbf16, #tpu.memory_space<vmem>>, vector<256x48xbf16>
    %c0_4 = arith.constant 0 : index
    %c0_5 = arith.constant 0 : index
    %5 = vector.load %arg4[%c0_4, %c0_5] : memref<48x128xbf16, #tpu.memory_space<vmem>>, vector<48x128xbf16>
    %cst = arith.constant dense<0.000000e+00> : vector<256x128xf32>
    %6 = tpu.matmul %4, %5, %cst {dimension_numbers = #tpu.dot_dimension_numbers<[1], [0], [0], [1], [0, 0, 1, 1], [], []>} : vector<256x48xbf16>, vector<48x128xbf16>, vector<256x128xf32> -> vector<256x128xf32>
    %7 = arith.addf %3, %6 : vector<256x128xf32>
    %c0_6 = arith.constant 0 : index
    %c0_7 = arith.constant 0 : index
    %8 = vector.load %arg7[%c0_6, %c0_7] : memref<256x128xf32, #tpu.memory_space<vmem>>, vector<256x128xf32>
    tpu.vector_store %arg7[%c0_6, %c0_7], %7 {strides = array<i32>} : memref<256x128xf32, #tpu.memory_space<vmem>>, vector<256x128xf32>,
    %c0_i32_8 = arith.constant 0 : i32
    %9 = arith.cmpi eq, %arg2, %c0_i32_8 : i32
    %10 = arith.extui %9 : i1 to i32
    %c0_i32_9 = arith.constant 0 : i32
    %11 = arith.cmpi ne, %10, %c0_i32_9 : i32
    scf.if %11 {
      %c0_10 = arith.constant 0 : index
      %c0_11 = arith.constant 0 : index
      %12 = vector.load %arg7[%c0_10, %c0_11] : memref<256x128xf32, #tpu.memory_space<vmem>>, vector<256x128xf32>
      %c0_12 = arith.constant 0 : index
      %c0_13 = arith.constant 0 : index
      %13 = vector.load %arg5[%c0_12, %c0_13] : memref<1x128xf32, #tpu.memory_space<vmem>>, vector<1x128xf32>
      %14 = vector.broadcast %13 : vector<1x128xf32> to vector<256x128xf32>
      %15 = arith.addf %12, %14 : vector<256x128xf32>
      %cst_14 = arith.constant 0.000000e+00 : f32
      %16 = vector.broadcast %cst_14 : f32 to vector<256x128xf32>
      %17 = arith.maximumf %15, %16 : vector<256x128xf32>
      %cst_15 = arith.constant 6.000000e+00 : f32
      %18 = vector.broadcast %cst_15 : f32 to vector<256x128xf32>
      %19 = arith.minimumf %17, %18 : vector<256x128xf32>
      %20 = arith.truncf %19 : vector<256x128xf32> to vector<256x128xbf16>
      %c0_16 = arith.constant 0 : index
      %c0_17 = arith.constant 0 : index
      %21 = vector.load %arg6[%c0_16, %c0_17] : memref<256x128xbf16, #tpu.memory_space<vmem>>, vector<256x128xbf16>
      tpu.vector_store %arg6[%c0_16, %c0_17], %20 {strides = array<i32>} : memref<256x128xbf16, #tpu.memory_space<vmem>>, vector<256x128xbf16>,
    } else {
    }
    return
  }
  func.func @transform_0(%arg0: i32, %arg1: i32, %arg2: i32) -> (i32, i32) {
    %c0_i32 = arith.constant 0 : i32
    return %arg0, %arg2 : i32, i32
  }
  func.func @transform_1(%arg0: i32, %arg1: i32, %arg2: i32) -> (i32, i32) {
    %c0_i32 = arith.constant 0 : i32
    return %arg2, %arg1 : i32, i32
  }
  func.func @transform_2(%arg0: i32, %arg1: i32, %arg2: i32) -> (i32, i32) {
    %c0_i32 = arith.constant 0 : i32
    %c0_i32_0 = arith.constant 0 : i32
    return %c0_i32, %arg1 : i32, i32
  }
  func.func @transform_3(%arg0: i32, %arg1: i32, %arg2: i32) -> (i32, i32) {
    %c0_i32 = arith.constant 0 : i32
    return %arg0, %arg1 : i32, i32
  }
}

</mosaic_0001>

<llo_original>
// kernel: conv_bn_relu6.1
$region0: #{conv_bn_relu6.1}
  #allocation0 [shape = 'u32[]', space=smem, size = 0x4, offset = 0x4, fixed_abs, tag = 'smem constant byte address 0x4 - core index']
  #allocation1 [shape = 'u32[144,128]{1,0:T(1,128)}', space=vmem, size = 0x12000, scoped, tag = 'internal scratch']
  #allocation2 [shape = 'f32[256,128]{1,0:T(8,128)}', space=vmem, size = 0x20000, scoped, tag = 'scratch operand']
  %s0 = inlined_call_operand.vmem [shape: bf16[512,48], index: 0, kind: input, shape index: {}]
  %s1 = inlined_call_operand.vmem [shape: bf16[48,128], index: 1, kind: input, shape index: {}]
  %s2 = inlined_call_operand.vmem [shape: f32[1,128], index: 2, kind: input, shape index: {}]
  %s3 = inlined_call_operand.vmem [shape: bf16[512,128], index: 3, kind: output, shape index: {}]
  %s4 = sld [smem:[#allocation0]]
  $region53: #{conv_bn_relu6.1} parent=0
    _
  %s6 = ssub.s32 1, %s4
  %s7 = scalar_select 0, %s6, %s4
  loop: start=0, step=1, limit=4
  $region2: #{conv_bn_relu6.1} parent=0 // loop_pre_header
    _
  $region3: #{conv_bn_relu6.1} parent=0 // loop_header
    %s9 = sphi 0, %s13
    %p10 = scmp.ge.s32.totalorder %s9, 4
    %s16 = sphi 0, %s35
    %s17 = sphi 0, %s31
    %s18 = sphi 0, %s27
    %s19 = sphi 0, %s16
    %s20 = sphi 0, %s17
    %s21 = sphi 0, %s18
    %s22 = sphi 0, %s19
    %s23 = sphi 0, %s20
    %s24 = sphi 0, %s21
    %s40 = sphi 0, %s42
    %s43 = sphi 0, %s40
    %s44 = sphi 0, %s43
    %s60 = sphi 0, %s44
    %s68 = sphi 0, %s70
    %s71 = sphi 0, %s68
    %s72 = sphi 0, %s71
    %s88 = sphi 0, %s72
    %s94 = sphi 0, %s96
    %s97 = sphi 0, %s94
    %s98 = sphi 0, %s97
    %s114 = sphi 0, %s98
    %s122 = sphi 0, %s124
    %s125 = sphi 0, %s122
    %s126 = sphi 0, %s125
    %s142 = sphi 0, %s126
  $region4: #{conv_bn_relu6.1} parent=0 // loop_header_branch
    %12 = sbr.rel (%p10) target = $region8
  $region5: #{conv_bn_relu6.1} parent=0 // loop_body
    %s14 = ssub.s32 %s9, 1
    %s15 = ssub.s32 %s9, 2
    %s25 = sadd.s32 1, %s18
    %p26 = scmp.ge.s32.totalorder %s25, 1
    %s27 = scalar_select %p26, 0, %s25
    %s28 = sadd.s32 1, %s17
    %s29 = scalar_select %p26, %s28, %s17
    %p30 = scmp.ge.s32.totalorder %s29, 1
    %s31 = scalar_select %p30, 0, %s29
    %s32 = sadd.s32 1, %s16
    %s33 = scalar_select %p30, %s32, %s16
    %p34 = scmp.ge.s32.totalorder %s33, 2
    %s35 = scalar_select %p34, 0, %s33
    %s36 = ssub.s32 %s16, %s35
    %s37 = ssub.s32 %s18, %s27
    %s38 = sor.u32 %s36, %s37
    %p39 = scmp.eq.s32.totalorder %s38, 0
    %s41 = sadd.s32 %s40, 1
    %s42 = scalar_select %p39, %s40, %s41
    %p45 = pneg %p39
    %p46 = scmp.eq.s32.totalorder %s9, 1
    %p47 = por %p45, %p46
    %p48 = scmp.ne.s32.totalorder %s40, %s43
    %p49 = scmp.eq.s32.totalorder %s9, 0
    %p50 = por %p48, %p49
    %p51 = scmp.ne.s32.totalorder %s40, %s43
    %p52 = scmp.eq.s32.totalorder %s14, 1
    %p53 = por %p51, %p52
    %p54 = scmp.ne.s32.totalorder %s43, %s44
    %p55 = scmp.eq.s32.totalorder %s14, 0
    %p56 = por %p54, %p55
    %p57 = scmp.ne.s32.totalorder %s43, %s44
    %p58 = scmp.eq.s32.totalorder %s15, 1
    %p59 = por %p57, %p58
    %p61 = scmp.ne.s32.totalorder %s44, %s60
    %p62 = scmp.eq.s32.totalorder %s15, 0
    %p63 = por %p61, %p62
    %s64 = ssub.s32 %s18, %s27
    %s65 = ssub.s32 %s17, %s31
    %s66 = sor.u32 %s64, %s65
    %p67 = scmp.eq.s32.totalorder %s66, 0
    %s69 = sadd.s32 %s68, 1
    %s70 = scalar_select %p67, %s68, %s69
    %p73 = pneg %p67
    %p74 = scmp.eq.s32.totalorder %s9, 1
    %p75 = por %p73, %p74
    %p76 = scmp.ne.s32.totalorder %s68, %s71
    %p77 = scmp.eq.s32.totalorder %s9, 0
    %p78 = por %p76, %p77
    %p79 = scmp.ne.s32.totalorder %s68, %s71
    %p80 = scmp.eq.s32.totalorder %s14, 1
    %p81 = por %p79, %p80
    %p82 = scmp.ne.s32.totalorder %s71, %s72
    %p83 = scmp.eq.s32.totalorder %s14, 0
    %p84 = por %p82, %p83
    %p85 = scmp.ne.s32.totalorder %s71, %s72
    %p86 = scmp.eq.s32.totalorder %s15, 1
    %p87 = por %p85, %p86
    %p89 = scmp.ne.s32.totalorder %s72, %s88
    %p90 = scmp.eq.s32.totalorder %s15, 0
    %p91 = por %p89, %p90
    %s92 = ssub.s32 %s17, %s31
    %p93 = scmp.eq.s32.totalorder %s92, 0
    %s95 = sadd.s32 %s94, 1
    %s96 = scalar_select %p93, %s94, %s95
    %p99 = pneg %p93
    %p100 = scmp.eq.s32.totalorder %s9, 1
    %p101 = por %p99, %p100
    %p102 = scmp.ne.s32.totalorder %s94, %s97
    %p103 = scmp.eq.s32.totalorder %s9, 0
    %p104 = por %p102, %p103
    %p105 = scmp.ne.s32.totalorder %s94, %s97
    %p106 = scmp.eq.s32.totalorder %s14, 1
    %p107 = por %p105, %p106
    %p108 = scmp.ne.s32.totalorder %s97, %s98
    %p109 = scmp.eq.s32.totalorder %s14, 0
    %p110 = por %p108, %p109
    %p111 = scmp.ne.s32.totalorder %s97, %s98
    %p112 = scmp.eq.s32.totalorder %s15, 1
    %p113 = por %p111, %p112
    %p115 = scmp.ne.s32.totalorder %s98, %s114
    %p116 = scmp.eq.s32.totalorder %s15, 0
    %p117 = por %p115, %p116
    %s118 = ssub.s32 %s16, %s35
    %s119 = ssub.s32 %s17, %s31
    %s120 = sor.u32 %s118, %s119
    %p121 = scmp.eq.s32.totalorder %s120, 0
    %s123 = sadd.s32 %s122, 1
    %s124 = scalar_select %p121, %s122, %s123
    %p127 = pneg %p121
    %p128 = scmp.eq.s32.totalorder %s9, 1
    %p129 = por %p127, %p128
    %p130 = scmp.ne.s32.totalorder %s122, %s125
    %p131 = scmp.eq.s32.totalorder %s9, 0
    %p132 = por %p130, %p131
    %p133 = scmp.ne.s32.totalorder %s122, %s125
    %p134 = scmp.eq.s32.totalorder %s14, 1
    %p135 = por %p133, %p134
    %p136 = scmp.ne.s32.totalorder %s125, %s126
    %p137 = scmp.eq.s32.totalorder %s14, 0
    %p138 = por %p136, %p137
    %p139 = scmp.ne.s32.totalorder %s125, %s126
    %p140 = scmp.eq.s32.totalorder %s15, 1
    %p141 = por %p139, %p140
    %p143 = scmp.ne.s32.totalorder %s126, %s142
    %p144 = scmp.eq.s32.totalorder %s15, 0
    %p145 = por %p143, %p144
    %p146 = scmp.le.s32.totalorder 1, %s9
    %p147 = scmp.lt.s32.totalorder %s9, 3
    %p148 = pnand %p146, %p147
    %p149 = pneg %p148
    // Predicated region
    $region9: #{conv_bn_relu6.1} parent=5 // pred_check
      _
    $region10: #{conv_bn_relu6.1} parent=5 // pred_check_branch
      %151 = sbr.rel (%p148) target = $region12
    $region11: #{conv_bn_relu6.1} parent=5 // pred_region
      %s152 = ssub.s32 %s9, 1
      // Predicated region
      $region13: #{conv_bn_relu6.1} parent=11 // pred_check
        %p153 = pneg %p84
      $region14: #{conv_bn_relu6.1} parent=11 // pred_check_branch
        %155 = sbr.rel (%p153) target = $region16
      $region15: #{conv_bn_relu6.1} parent=11 // pred_region
        %s156 = smul.u32 6, %s21
        %p157 = scmp.lt.s32.totalorder %s156, 5
        %s158 = scalar_select %p157, %s156, 5
        %p159 = scmp.lt.s32.totalorder %s20, 0
        %s160 = scalar_select %p159, %s20, 0
        %s161 = sadd.s32 %s160, %s158
        %s162 = smul.addr %s161, 4
        %s163 = scalar_lea.vmem %s1, %s162
        %s164 = smul.u32 6, %s21
      $region16: #{conv_bn_relu6.1} parent=11 // pred_fallthru
        _
      // Predicated region
      $region17: #{conv_bn_relu6.1} parent=11 // pred_check
        %p165 = pneg %p110
      $region18: #{conv_bn_relu6.1} parent=11 // pred_check_branch
        %167 = sbr.rel (%p165) target = $region20
      $region19: #{conv_bn_relu6.1} parent=11 // pred_region
        %p168 = scmp.lt.s32.totalorder %s20, 0
        %s169 = scalar_select %p168, %s20, 0
        %s170 = scalar_lea.vmem %s2, %s169
      $region20: #{conv_bn_relu6.1} parent=11 // pred_fallthru
        _
    $region12: #{conv_bn_relu6.1} parent=5 // pred_fallthru
      _
    %p171 = scmp.lt.s32.totalorder %s9, 2
    // Predicated region
    $region21: #{conv_bn_relu6.1} parent=5 // pred_check
      %p172 = pneg %p171
    $region22: #{conv_bn_relu6.1} parent=5 // pred_check_branch
      %174 = sbr.rel (%p172) target = $region24
    $region23: #{conv_bn_relu6.1} parent=5 // pred_region
      // Predicated region
      $region25: #{conv_bn_relu6.1} parent=23 // pred_check
        %p175 = pneg %p50
      $region26: #{conv_bn_relu6.1} parent=23 // pred_check_branch
        %177 = sbr.rel (%p175) target = $region28
      $region27: #{conv_bn_relu6.1} parent=23 // pred_region
        %s178 = smul.u32 32, %s16
        %p179 = scmp.lt.s32.totalorder %s178, 63
        %s180 = scalar_select %p179, %s178, 63
        %p181 = scmp.lt.s32.totalorder %s18, 0
        %s182 = scalar_select %p181, %s18, 0
        %s183 = sadd.s32 %s182, %s180
        %s184 = smul.addr %s183, 4
        %s185 = scalar_lea.vmem %s0, %s184
        %s186 = smul.u32 32, %s16
      $region28: #{conv_bn_relu6.1} parent=23 // pred_fallthru
        _
    $region24: #{conv_bn_relu6.1} parent=5 // pred_fallthru
      _
    %p187 = scmp.le.s32.totalorder 1, %s9
    %p188 = scmp.lt.s32.totalorder %s9, 3
    %p189 = pnand %p187, %p188
    %p190 = pneg %p189
    // Predicated region
    $region29: #{conv_bn_relu6.1} parent=5 // pred_check
      _
    $region30: #{conv_bn_relu6.1} parent=5 // pred_check_branch
      %192 = sbr.rel (%p189) target = $region32
    $region31: #{conv_bn_relu6.1} parent=5 // pred_region
      %s193 = ssub.s32 %s9, 1
      %s194 = smul.u32 32, %s19
      %p195 = scmp.lt.s32.totalorder %s194, 63
      %s196 = scalar_select %p195, %s194, 63
      %p197 = scmp.lt.s32.totalorder %s21, 0
      %s198 = scalar_select %p197, %s21, 0
      %s199 = sadd.s32 %s198, %s196
      %s200 = smul.addr %s199, 4
      %s201 = scalar_lea.vmem %s0, %s200
      %p202 = pneg %p56
      %p203 = pneg %p53
      %s204 = smul.u32 6, %s21
      %p205 = scmp.lt.s32.totalorder %s204, 5
      %s206 = scalar_select %p205, %s204, 5
      %p207 = scmp.lt.s32.totalorder %s20, 0
      %s208 = scalar_select %p207, %s20, 0
      %s209 = sadd.s32 %s208, %s206
      %s210 = smul.addr %s209, 4
      %s211 = scalar_lea.vmem %s1, %s210
      %p212 = pneg %p84
      %p213 = pneg %p81
      %p214 = scmp.lt.s32.totalorder %s20, 0
      %s215 = scalar_select %p214, %s20, 0
      %s216 = scalar_lea.vmem %s2, %s215
      %p217 = pneg %p110
      %p218 = pneg %p107
      %p219 = pneg %p138
      %p220 = pneg %p135
      %s221 = smul.u32 32, %s19
      %p222 = scmp.lt.s32.totalorder %s221, 63
      %s223 = scalar_select %p222, %s221, 63
      %p224 = scmp.lt.s32.totalorder %s20, 0
      %s225 = scalar_select %p224, %s20, 0
      %s226 = sadd.s32 %s225, %s223
      %s227 = smul.addr %s226, 4
      %s228 = scalar_lea.vmem %s3, %s227
      %s229 = smul.u32 32, %s19
      %p230 = scmp.lt.s32.totalorder %s229, 63
      %s231 = scalar_select %p230, %s229, 63
      %p232 = scmp.lt.s32.totalorder %s21, 0
      %s233 = scalar_select %p232, %s21, 0
      %s234 = sadd.s32 %s233, %s231
      %s235 = smul.addr %s234, 4
      %s236 = scalar_lea.vmem %s0, %s235
      %s237 = smul.u32 32, %s19
      %s238 = smul.u32 6, %s21
      %p239 = scmp.lt.s32.totalorder %s238, 5
      %s240 = scalar_select %p239, %s238, 5
      %p241 = scmp.lt.s32.totalorder %s20, 0
      %s242 = scalar_select %p241, %s20, 0
      %s243 = sadd.s32 %s242, %s240
      %s244 = smul.addr %s243, 4
      %s245 = scalar_lea.vmem %s1, %s244
      %s246 = smul.u32 6, %s21
      %p247 = scmp.lt.s32.totalorder %s20, 0
      %s248 = scalar_select %p247, %s20, 0
      %s249 = scalar_lea.vmem %s2, %s248
      %s250 = smul.u32 32, %s19
      %p251 = scmp.lt.s32.totalorder %s250, 63
      %s252 = scalar_select %p251, %s250, 63
      %p253 = scmp.lt.s32.totalorder %s20, 0
      %s254 = scalar_select %p253, %s20, 0
      %s255 = sadd.s32 %s254, %s252
      %s256 = smul.addr %s255, 4
      %s257 = scalar_lea.vmem %s3, %s256
      %s258 = smul.u32 32, %s19
      %p260 = scmp.eq.s32.totalorder %s21, 0
      // Predicated region
      $region33: #{conv_bn_relu6.1} parent=31 // pred_check
        %p261 = pneg %p260
      $region34: #{conv_bn_relu6.1} parent=31 // pred_check_branch
        %263 = sbr.rel (%p261) target = $region36
      $region35: #{conv_bn_relu6.1} parent=31 // pred_region
        %264 = vst [vmem:[#allocation2] sm:$0xff] 0.0
        %265 = vst [vmem:[#allocation2 + $0x8] sm:$0xff] 0.0
        %266 = vst [vmem:[#allocation2 + $0x10] sm:$0xff] 0.0
        %267 = vst [vmem:[#allocation2 + $0x18] sm:$0xff] 0.0
        %268 = vst [vmem:[#allocation2 + $0x20] sm:$0xff] 0.0
        %269 = vst [vmem:[#allocation2 + $0x28] sm:$0xff] 0.0
        %270 = vst [vmem:[#allocation2 + $0x30] sm:$0xff] 0.0
        %271 = vst [vmem:[#allocation2 + $0x38] sm:$0xff] 0.0
        %272 = vst [vmem:[#allocation2 + $0x40] sm:$0xff] 0.0
        %273 = vst [vmem:[#allocation2 + $0x48] sm:$0xff] 0.0
        %274 = vst [vmem:[#allocation2 + $0x50] sm:$0xff] 0.0
        %275 = vst [vmem:[#allocation2 + $0x58] sm:$0xff] 0.0
        %276 = vst [vmem:[#allocation2 + $0x60] sm:$0xff] 0.0
        %277 = vst [vmem:[#allocation2 + $0x68] sm:$0xff] 0.0
        %278 = vst [vmem:[#allocation2 + $0x70] sm:$0xff] 0.0
        %279 = vst [vmem:[#allocation2 + $0x78] sm:$0xff] 0.0
        %280 = vst [vmem:[#allocation2 + $0x80] sm:$0xff] 0.0
        %281 = vst [vmem:[#allocation2 + $0x88] sm:$0xff] 0.0
        %282 = vst [vmem:[#allocation2 + $0x90] sm:$0xff] 0.0
        %283 = vst [vmem:[#allocation2 + $0x98] sm:$0xff] 0.0
        %284 = vst [vmem:[#allocation2 + $0xa0] sm:$0xff] 0.0
        %285 = vst [vmem:[#allocation2 + $0xa8] sm:$0xff] 0.0
        %286 = vst [vmem:[#allocation2 + $0xb0] sm:$0xff] 0.0
        %287 = vst [vmem:[#allocation2 + $0xb8] sm:$0xff] 0.0
        %288 = vst [vmem:[#allocation2 + $0xc0] sm:$0xff] 0.0
        %289 = vst [vmem:[#allocation2 + $0xc8] sm:$0xff] 0.0
        %290 = vst [vmem:[#allocation2 + $0xd0] sm:$0xff] 0.0
        %291 = vst [vmem:[#allocation2 + $0xd8] sm:$0xff] 0.0
        %292 = vst [vmem:[#allocation2 + $0xe0] sm:$0xff] 0.0
        %293 = vst [vmem:[#allocation2 + $0xe8] sm:$0xff] 0.0
        %294 = vst [vmem:[#allocation2 + $0xf0] sm:$0xff] 0.0
        %295 = vst [vmem:[#allocation2 + $0xf8] sm:$0xff] 0.0
      $region36: #{conv_bn_relu6.1} parent=31 // pred_fallthru
        _
      %v296 = vld [vmem:[#allocation2] sm:$0xff]
      %v297 = vld [vmem:[#allocation2 + $0x8] sm:$0xff]
      %v298 = vld [vmem:[#allocation2 + $0x10] sm:$0xff]
      %v299 = vld [vmem:[#allocation2 + $0x18] sm:$0xff]
      %v300 = vld [vmem:[#allocation2 + $0x20] sm:$0xff]
      %v301 = vld [vmem:[#allocation2 + $0x28] sm:$0xff]
      %v302 = vld [vmem:[#allocation2 + $0x30] sm:$0xff]
      %v303 = vld [vmem:[#allocation2 + $0x38] sm:$0xff]
      %v304 = vld [vmem:[#allocation2 + $0x40] sm:$0xff]
      %v305 = vld [vmem:[#allocation2 + $0x48] sm:$0xff]
      %v306 = vld [vmem:[#allocation2 + $0x50] sm:$0xff]
      %v307 = vld [vmem:[#allocation2 + $0x58] sm:$0xff]
      %v308 = vld [vmem:[#allocation2 + $0x60] sm:$0xff]
      %v309 = vld [vmem:[#allocation2 + $0x68] sm:$0xff]
      %v310 = vld [vmem:[#allocation2 + $0x70] sm:$0xff]
      %v311 = vld [vmem:[#allocation2 + $0x78] sm:$0xff]
      %v312 = vld [vmem:[#allocation2 + $0x80] sm:$0xff]
      %v313 = vld [vmem:[#allocation2 + $0x88] sm:$0xff]
      %v314 = vld [vmem:[#allocation2 + $0x90] sm:$0xff]
      %v315 = vld [vmem:[#allocation2 + $0x98] sm:$0xff]
      %v316 = vld [vmem:[#allocation2 + $0xa0] sm:$0xff]
      %v317 = vld [vmem:[#allocation2 + $0xa8] sm:$0xff]
      %v318 = vld [vmem:[#allocation2 + $0xb0] sm:$0xff]
      %v319 = vld [vmem:[#allocation2 + $0xb8] sm:$0xff]
      %v320 = vld [vmem:[#allocation2 + $0xc0] sm:$0xff]
      %v321 = vld [vmem:[#allocation2 + $0xc8] sm:$0xff]
      %v322 = vld [vmem:[#allocation2 + $0xd0] sm:$0xff]
      %v323 = vld [vmem:[#allocation2 + $0xd8] sm:$0xff]
      %v324 = vld [vmem:[#allocation2 + $0xe0] sm:$0xff]
      %v325 = vld [vmem:[#allocation2 + $0xe8] sm:$0xff]
      %v326 = vld [vmem:[#allocation2 + $0xf0] sm:$0xff]
      %v327 = vld [vmem:[#allocation2 + $0xf8] sm:$0xff]
      %v328 = vld [vmem:[%s236] sm:$0xf]
      %v329 = vld [vmem:[%s236 + $0x4] sm:$0xf]
      %v330 = vld [vmem:[%s236 + $0x8] sm:$0xf]
      %v331 = vld [vmem:[%s236 + $0xc] sm:$0xf]
      %v332 = vld [vmem:[%s236 + $0x10] sm:$0xf]
      %v333 = vld [vmem:[%s236 + $0x14] sm:$0xf]
      %v334 = vld [vmem:[%s236 + $0x18] sm:$0xf]
      %v335 = vld [vmem:[%s236 + $0x1c] sm:$0xf]
      %v336 = vld [vmem:[%s236 + $0x20] sm:$0xf]
      %v337 = vld [vmem:[%s236 + $0x24] sm:$0xf]
      %v338 = vld [vmem:[%s236 + $0x28] sm:$0xf]
      %v339 = vld [vmem:[%s236 + $0x2c] sm:$0xf]
      %v340 = vld [vmem:[%s236 + $0x30] sm:$0xf]
      %v341 = vld [vmem:[%s236 + $0x34] sm:$0xf]
      %v342 = vld [vmem:[%s236 + $0x38] sm:$0xf]
      %v343 = vld [vmem:[%s236 + $0x3c] sm:$0xf]
      %v344 = vld [vmem:[%s236 + $0x40] sm:$0xf]
      %v345 = vld [vmem:[%s236 + $0x44] sm:$0xf]
      %v346 = vld [vmem:[%s236 + $0x48] sm:$0xf]
      %v347 = vld [vmem:[%s236 + $0x4c] sm:$0xf]
      %v348 = vld [vmem:[%s236 + $0x50] sm:$0xf]
      %v349 = vld [vmem:[%s236 + $0x54] sm:$0xf]
      %v350 = vld [vmem:[%s236 + $0x58] sm:$0xf]
      %v351 = vld [vmem:[%s236 + $0x5c] sm:$0xf]
      %v352 = vld [vmem:[%s236 + $0x60] sm:$0xf]
      %v353 = vld [vmem:[%s236 + $0x64] sm:$0xf]
      %v354 = vld [vmem:[%s236 + $0x68] sm:$0xf]
      %v355 = vld [vmem:[%s236 + $0x6c] sm:$0xf]
      %v356 = vld [vmem:[%s236 + $0x70] sm:$0xf]
      %v357 = vld [vmem:[%s236 + $0x74] sm:$0xf]
      %v358 = vld [vmem:[%s236 + $0x78] sm:$0xf]
      %v359 = vld [vmem:[%s236 + $0x7c] sm:$0xf]
      %v360 = vld [vmem:[%s245] sm:$0xf]
      %v361 = vld [vmem:[%s245 + $0x4] sm:$0xf]
      %v362 = vld [vmem:[%s245 + $0x8] sm:$0xf]
      %v363 = vld [vmem:[%s245 + $0xc] sm:$0xf]
      %v364 = vld [vmem:[%s245 + $0x10] sm:$0xf]
      %v365 = vld [vmem:[%s245 + $0x14] sm:$0xf]
      %v398 = vunpack.c.l.b16 %v328
      %v399 = vunpack.c.l.b16 %v329
      %v400 = vunpack.c.l.b16 %v330
      %v401 = vunpack.c.l.b16 %v331
      %v402 = vunpack.c.l.b16 %v332
      %v403 = vunpack.c.l.b16 %v333
      %v404 = vunpack.c.l.b16 %v334
      %v405 = vunpack.c.l.b16 %v335
      %v406 = vunpack.c.l.b16 %v336
      %v407 = vunpack.c.l.b16 %v337
      %v408 = vunpack.c.l.b16 %v338
      %v409 = vunpack.c.l.b16 %v339
      %v410 = vunpack.c.l.b16 %v340
      %v411 = vunpack.c.l.b16 %v341
      %v412 = vunpack.c.l.b16 %v342
      %v413 = vunpack.c.l.b16 %v343
      %v414 = vunpack.c.l.b16 %v344
      %v415 = vunpack.c.l.b16 %v345
      %v416 = vunpack.c.l.b16 %v346
      %v417 = vunpack.c.l.b16 %v347
      %v418 = vunpack.c.l.b16 %v348
      %v419 = vunpack.c.l.b16 %v349
      %v420 = vunpack.c.l.b16 %v350
      %v421 = vunpack.c.l.b16 %v351
      %v422 = vunpack.c.l.b16 %v352
      %v423 = vunpack.c.l.b16 %v353
      %v424 = vunpack.c.l.b16 %v354
      %v425 = vunpack.c.l.b16 %v355
      %v426 = vunpack.c.l.b16 %v356
      %v427 = vunpack.c.l.b16 %v357
      %v428 = vunpack.c.l.b16 %v358
      %v429 = vunpack.c.l.b16 %v359
      %v430 = vpack.c.b16 %v399, %v398
      %v431 = vpack.c.b16 %v401, %v400
      %v432 = vpack.c.b16 %v403, %v402
      %v433 = vpack.c.b16 %v405, %v404
      %v434 = vpack.c.b16 %v407, %v406
      %v435 = vpack.c.b16 %v409, %v408
      %v436 = vpack.c.b16 %v411, %v410
      %v437 = vpack.c.b16 %v413, %v412
      %v438 = vpack.c.b16 %v415, %v414
      %v439 = vpack.c.b16 %v417, %v416
      %v440 = vpack.c.b16 %v419, %v418
      %v441 = vpack.c.b16 %v421, %v420
      %v442 = vpack.c.b16 %v423, %v422
      %v443 = vpack.c.b16 %v425, %v424
      %v444 = vpack.c.b16 %v427, %v426
      %v445 = vpack.c.b16 %v429, %v428
      %v452 = vunpack.c.l.b16 %v360
      %v453 = vunpack.c.l.b16 %v361
      %v454 = vunpack.c.l.b16 %v362
      %v455 = vunpack.c.l.b16 %v363
      %v456 = vunpack.c.l.b16 %v364
      %v457 = vunpack.c.l.b16 %v365
      %v458 = vpack.c.b16 %v453, %v452
      %v459 = vpack.c.b16 %v455, %v454
      %v460 = vpack.c.b16 %v457, %v456
      %vm464 = vcmask 392192
      %v466 = vsel %vm464, %v430, 0
      %v469 = vsel %vm464, %v431, 0
      %v472 = vsel %vm464, %v432, 0
      %v475 = vsel %vm464, %v433, 0
      %v478 = vsel %vm464, %v434, 0
      %v481 = vsel %vm464, %v435, 0
      %v484 = vsel %vm464, %v436, 0
      %v487 = vsel %vm464, %v437, 0
      %v490 = vsel %vm464, %v438, 0
      %v493 = vsel %vm464, %v439, 0
      %v496 = vsel %vm464, %v440, 0
      %v499 = vsel %vm464, %v441, 0
      %v502 = vsel %vm464, %v442, 0
      %v505 = vsel %vm464, %v443, 0
      %v508 = vsel %vm464, %v444, 0
      %v511 = vsel %vm464, %v445, 0
      %513 = vmatprep.subr.bf16.mxu0 0
      %514 = vmatpush1.bf16.msra.mxu0 %v458
      %515 = vmatprep.subr.bf16.mxu0 0
      %516 = vmatpush1.bf16.msra.mxu0 %v459
      %517 = vmatprep.subr.bf16.mxu0 0
      %518 = vmatpush1.bf16.msra.mxu0 %v460
      %519 = vmatprep.subr.bf16.mxu0 0
      %520 = vmatpush1.bf16.msra.mxu0 0
      %521 = vmatprep.subr.bf16.mxu0 0
      %522 = vmatpush1.bf16.msra.mxu0 0
      %523 = vmatprep.subr.bf16.mxu0 0
      %524 = vmatpush1.bf16.msra.mxu0 0
      %525 = vmatprep.subr.bf16.mxu0 0
      %526 = vmatpush1.bf16.msra.mxu0 0
      %527 = vmatprep.subr.bf16.mxu0 0
      %528 = vmatpush1.bf16.msra.mxu0 0
      %529 = vmatprep.subr.bf16.mxu0 0
      %530 = vmatpush1.bf16.msra.mxu0 0
      %531 = vmatprep.subr.bf16.mxu0 0
      %532 = vmatpush1.bf16.msra.mxu0 0
      %533 = vmatprep.subr.bf16.mxu0 0
      %534 = vmatpush1.bf16.msra.mxu0 0
      %535 = vmatprep.subr.bf16.mxu0 0
      %536 = vmatpush1.bf16.msra.mxu0 0
      %537 = vmatprep.subr.bf16.mxu0 0
      %538 = vmatpush1.bf16.msra.mxu0 0
      %539 = vmatprep.subr.bf16.mxu0 0
      %540 = vmatpush1.bf16.msra.mxu0 0
      %541 = vmatprep.subr.bf16.mxu0 0
      %542 = vmatpush1.bf16.msra.mxu0 0
      %543 = vmatprep.subr.bf16.mxu0 0
      %544 = vmatpush1.bf16.msra.mxu0 0
      %545 = vmatprep.mubr.bf16.mxu0 0
      %546 = vmatmul.mubr.bf16.gmra.mrb[0].mxu0 %v466
      %v547 = vpop.f32.mrb[0].mxu0
      %v548 = vadd.f32 0.0, %v547
      %v549 = vpop.f32.mrb[0].mxu0
      %v550 = vpop.f32.mrb[0].mxu0
      %v551 = vadd.f32 0.0, %v550
      %v552 = vpop.f32.mrb[0].mxu0
      %553 = vmatprep.mubr.bf16.mxu0 0
      %554 = vmatmul.mubr.bf16.gmra.mrb[0].mxu0 %v469
      %v555 = vpop.f32.mrb[0].mxu0
      %v556 = vadd.f32 0.0, %v555
      %v557 = vpop.f32.mrb[0].mxu0
      %v558 = vpop.f32.mrb[0].mxu0
      %v559 = vadd.f32 0.0, %v558
      %v560 = vpop.f32.mrb[0].mxu0
      %561 = vmatprep.mubr.bf16.mxu0 0
      %562 = vmatmul.mubr.bf16.gmra.mrb[0].mxu0 %v472
      %v563 = vpop.f32.mrb[0].mxu0
      %v564 = vadd.f32 0.0, %v563
      %v565 = vpop.f32.mrb[0].mxu0
      %v566 = vpop.f32.mrb[0].mxu0
      %v567 = vadd.f32 0.0, %v566
      %v568 = vpop.f32.mrb[0].mxu0
      %569 = vmatprep.mubr.bf16.mxu0 0
      %570 = vmatmul.mubr.bf16.gmra.mrb[0].mxu0 %v475
      %v571 = vpop.f32.mrb[0].mxu0
      %v572 = vadd.f32 0.0, %v571
      %v573 = vpop.f32.mrb[0].mxu0
      %v574 = vpop.f32.mrb[0].mxu0
      %v575 = vadd.f32 0.0, %v574
      %v576 = vpop.f32.mrb[0].mxu0
      %577 = vmatprep.mubr.bf16.mxu0 0
      %578 = vmatmul.mubr.bf16.gmra.mrb[0].mxu0 %v478
      %v579 = vpop.f32.mrb[0].mxu0
      %v580 = vadd.f32 0.0, %v579
      %v581 = vpop.f32.mrb[0].mxu0
      %v582 = vpop.f32.mrb[0].mxu0
      %v583 = vadd.f32 0.0, %v582
      %v584 = vpop.f32.mrb[0].mxu0
      %585 = vmatprep.mubr.bf16.mxu0 0
      %586 = vmatmul.mubr.bf16.gmra.mrb[0].mxu0 %v481
      %v587 = vpop.f32.mrb[0].mxu0
      %v588 = vadd.f32 0.0, %v587
      %v589 = vpop.f32.mrb[0].mxu0
      %v590 = vpop.f32.mrb[0].mxu0
      %v591 = vadd.f32 0.0, %v590
      %v592 = vpop.f32.mrb[0].mxu0
      %593 = vmatprep.mubr.bf16.mxu0 0
      %594 = vmatmul.mubr.bf16.gmra.mrb[0].mxu0 %v484
      %v595 = vpop.f32.mrb[0].mxu0
      %v596 = vadd.f32 0.0, %v595
      %v597 = vpop.f32.mrb[0].mxu0
      %v598 = vpop.f32.mrb[0].mxu0
      %v599 = vadd.f32 0.0, %v598
      %v600 = vpop.f32.mrb[0].mxu0
      %601 = vmatprep.mubr.bf16.mxu0 0
      %602 = vmatmul.mubr.bf16.gmra.mrb[0].mxu0 %v487
      %v603 = vpop.f32.mrb[0].mxu0
      %v604 = vadd.f32 0.0, %v603
      %v605 = vpop.f32.mrb[0].mxu0
      %v606 = vpop.f32.mrb[0].mxu0
      %v607 = vadd.f32 0.0, %v606
      %v608 = vpop.f32.mrb[0].mxu0
      %609 = vmatprep.mubr.bf16.mxu0 0
      %610 = vmatmul.mubr.bf16.gmra.mrb[0].mxu0 %v490
      %v611 = vpop.f32.mrb[0].mxu0
      %v612 = vadd.f32 0.0, %v611
      %v613 = vpop.f32.mrb[0].mxu0
      %v614 = vpop.f32.mrb[0].mxu0
      %v615 = vadd.f32 0.0, %v614
      %v616 = vpop.f32.mrb[0].mxu0
      %617 = vmatprep.mubr.bf16.mxu0 0
      %618 = vmatmul.mubr.bf16.gmra.mrb[0].mxu0 %v493
      %v619 = vpop.f32.mrb[0].mxu0
      %v620 = vadd.f32 0.0, %v619
      %v621 = vpop.f32.mrb[0].mxu0
      %v622 = vpop.f32.mrb[0].mxu0
      %v623 = vadd.f32 0.0, %v622
      %v624 = vpop.f32.mrb[0].mxu0
      %625 = vmatprep.mubr.bf16.mxu0 0
      %626 = vmatmul.mubr.bf16.gmra.mrb[0].mxu0 %v496
      %v627 = vpop.f32.mrb[0].mxu0
      %v628 = vadd.f32 0.0, %v627
      %v629 = vpop.f32.mrb[0].mxu0
      %v630 = vpop.f32.mrb[0].mxu0
      %v631 = vadd.f32 0.0, %v630
      %v632 = vpop.f32.mrb[0].mxu0
      %633 = vmatprep.mubr.bf16.mxu0 0
      %634 = vmatmul.mubr.bf16.gmra.mrb[0].mxu0 %v499
      %v635 = vpop.f32.mrb[0].mxu0
      %v636 = vadd.f32 0.0, %v635
      %v637 = vpop.f32.mrb[0].mxu0
      %v638 = vpop.f32.mrb[0].mxu0
      %v639 = vadd.f32 0.0, %v638
      %v640 = vpop.f32.mrb[0].mxu0
      %641 = vmatprep.mubr.bf16.mxu0 0
      %642 = vmatmul.mubr.bf16.gmra.mrb[0].mxu0 %v502
      %v643 = vpop.f32.mrb[0].mxu0
      %v644 = vadd.f32 0.0, %v643
      %v645 = vpop.f32.mrb[0].mxu0
      %v646 = vpop.f32.mrb[0].mxu0
      %v647 = vadd.f32 0.0, %v646
      %v648 = vpop.f32.mrb[0].mxu0
      %649 = vmatprep.mubr.bf16.mxu0 0
      %650 = vmatmul.mubr.bf16.gmra.mrb[0].mxu0 %v505
      %v651 = vpop.f32.mrb[0].mxu0
      %v652 = vadd.f32 0.0, %v651
      %v653 = vpop.f32.mrb[0].mxu0
      %v654 = vpop.f32.mrb[0].mxu0
      %v655 = vadd.f32 0.0, %v654
      %v656 = vpop.f32.mrb[0].mxu0
      %657 = vmatprep.mubr.bf16.mxu0 0
      %658 = vmatmul.mubr.bf16.gmra.mrb[0].mxu0 %v508
      %v659 = vpop.f32.mrb[0].mxu0
      %v660 = vadd.f32 0.0, %v659
      %v661 = vpop.f32.mrb[0].mxu0
      %v662 = vpop.f32.mrb[0].mxu0
      %v663 = vadd.f32 0.0, %v662
      %v664 = vpop.f32.mrb[0].mxu0
      %665 = vmatprep.mubr.bf16.mxu0 0
      %666 = vmatmul.mubr.bf16.gmra.mrb[0].mxu0 %v511
      %v667 = vpop.f32.mrb[0].mxu0
      %v668 = vadd.f32 0.0, %v667
      %v669 = vpop.f32.mrb[0].mxu0
      %v670 = vpop.f32.mrb[0].mxu0
      %v671 = vadd.f32 0.0, %v670
      %v672 = vpop.f32.mrb[0].mxu0
      %673 = vdwg.mxu0
      %v674 = vadd.f32 %v296, %v548
      %v675 = vadd.f32 %v297, %v551
      %v676 = vadd.f32 %v298, %v556
      %v677 = vadd.f32 %v299, %v559
      %v678 = vadd.f32 %v300, %v564
      %v679 = vadd.f32 %v301, %v567
      %v680 = vadd.f32 %v302, %v572
      %v681 = vadd.f32 %v303, %v575
      %v682 = vadd.f32 %v304, %v580
      %v683 = vadd.f32 %v305, %v583
      %v684 = vadd.f32 %v306, %v588
      %v685 = vadd.f32 %v307, %v591
      %v686 = vadd.f32 %v308, %v596
      %v687 = vadd.f32 %v309, %v599
      %v688 = vadd.f32 %v310, %v604
      %v689 = vadd.f32 %v311, %v607
      %v690 = vadd.f32 %v312, %v612
      %v691 = vadd.f32 %v313, %v615
      %v692 = vadd.f32 %v314, %v620
      %v693 = vadd.f32 %v315, %v623
      %v694 = vadd.f32 %v316, %v628
      %v695 = vadd.f32 %v317, %v631
      %v696 = vadd.f32 %v318, %v636
      %v697 = vadd.f32 %v319, %v639
      %v698 = vadd.f32 %v320, %v644
      %v699 = vadd.f32 %v321, %v647
      %v700 = vadd.f32 %v322, %v652
      %v701 = vadd.f32 %v323, %v655
      %v702 = vadd.f32 %v324, %v660
      %v703 = vadd.f32 %v325, %v663
      %v704 = vadd.f32 %v326, %v668
      %v705 = vadd.f32 %v327, %v671
      %706 = vst [vmem:[#allocation2] sm:$0xff] %v674
      %707 = vst [vmem:[#allocation2 + $0x8] sm:$0xff] %v675
      %708 = vst [vmem:[#allocation2 + $0x10] sm:$0xff] %v676
      %709 = vst [vmem:[#allocation2 + $0x18] sm:$0xff] %v677
      %710 = vst [vmem:[#allocation2 + $0x20] sm:$0xff] %v678
      %711 = vst [vmem:[#allocation2 + $0x28] sm:$0xff] %v679
      %712 = vst [vmem:[#allocation2 + $0x30] sm:$0xff] %v680
      %713 = vst [vmem:[#allocation2 + $0x38] sm:$0xff] %v681
      %714 = vst [vmem:[#allocation2 + $0x40] sm:$0xff] %v682
      %715 = vst [vmem:[#allocation2 + $0x48] sm:$0xff] %v683
      %716 = vst [vmem:[#allocation2 + $0x50] sm:$0xff] %v684
      %717 = vst [vmem:[#allocation2 + $0x58] sm:$0xff] %v685
      %718 = vst [vmem:[#allocation2 + $0x60] sm:$0xff] %v686
      %719 = vst [vmem:[#allocation2 + $0x68] sm:$0xff] %v687
      %720 = vst [vmem:[#allocation2 + $0x70] sm:$0xff] %v688
      %721 = vst [vmem:[#allocation2 + $0x78] sm:$0xff] %v689
      %722 = vst [vmem:[#allocation2 + $0x80] sm:$0xff] %v690
      %723 = vst [vmem:[#allocation2 + $0x88] sm:$0xff] %v691
      %724 = vst [vmem:[#allocation2 + $0x90] sm:$0xff] %v692
      %725 = vst [vmem:[#allocation2 + $0x98] sm:$0xff] %v693
      %726 = vst [vmem:[#allocation2 + $0xa0] sm:$0xff] %v694
      %727 = vst [vmem:[#allocation2 + $0xa8] sm:$0xff] %v695
      %728 = vst [vmem:[#allocation2 + $0xb0] sm:$0xff] %v696
      %729 = vst [vmem:[#allocation2 + $0xb8] sm:$0xff] %v697
      %730 = vst [vmem:[#allocation2 + $0xc0] sm:$0xff] %v698
      %731 = vst [vmem:[#allocation2 + $0xc8] sm:$0xff] %v699
      %732 = vst [vmem:[#allocation2 + $0xd0] sm:$0xff] %v700
      %733 = vst [vmem:[#allocation2 + $0xd8] sm:$0xff] %v701
      %734 = vst [vmem:[#allocation2 + $0xe0] sm:$0xff] %v702
      %735 = vst [vmem:[#allocation2 + $0xe8] sm:$0xff] %v703
      %736 = vst [vmem:[#allocation2 + $0xf0] sm:$0xff] %v704
      %737 = vst [vmem:[#allocation2 + $0xf8] sm:$0xff] %v705
      // Predicated region
      $region37: #{conv_bn_relu6.1} parent=31 // pred_check
        %p738 = pneg %p260
      $region38: #{conv_bn_relu6.1} parent=31 // pred_check_branch
        %740 = sbr.rel (%p738) target = $region40
      $region39: #{conv_bn_relu6.1} parent=31 // pred_region
        %v741 = vld [vmem:[#allocation2] sm:$0xff]
        %v742 = vld [vmem:[#allocation2 + $0x8] sm:$0xff]
        %v743 = vld [vmem:[#allocation2 + $0x10] sm:$0xff]
        %v744 = vld [vmem:[#allocation2 + $0x18] sm:$0xff]
        %v745 = vld [vmem:[#allocation2 + $0x20] sm:$0xff]
        %v746 = vld [vmem:[#allocation2 + $0x28] sm:$0xff]
        %v747 = vld [vmem:[#allocation2 + $0x30] sm:$0xff]
        %v748 = vld [vmem:[#allocation2 + $0x38] sm:$0xff]
        %v749 = vld [vmem:[#allocation2 + $0x40] sm:$0xff]
        %v750 = vld [vmem:[#allocation2 + $0x48] sm:$0xff]
        %v751 = vld [vmem:[#allocation2 + $0x50] sm:$0xff]
        %v752 = vld [vmem:[#allocation2 + $0x58] sm:$0xff]
        %v753 = vld [vmem:[#allocation2 + $0x60] sm:$0xff]
        %v754 = vld [vmem:[#allocation2 + $0x68] sm:$0xff]
        %v755 = vld [vmem:[#allocation2 + $0x70] sm:$0xff]
        %v756 = vld [vmem:[#allocation2 + $0x78] sm:$0xff]
        %v757 = vld [vmem:[#allocation2 + $0x80] sm:$0xff]
        %v758 = vld [vmem:[#allocation2 + $0x88] sm:$0xff]
        %v759 = vld [vmem:[#allocation2 + $0x90] sm:$0xff]
        %v760 = vld [vmem:[#allocation2 + $0x98] sm:$0xff]
        %v761 = vld [vmem:[#allocation2 + $0xa0] sm:$0xff]
        %v762 = vld [vmem:[#allocation2 + $0xa8] sm:$0xff]
        %v763 = vld [vmem:[#allocation2 + $0xb0] sm:$0xff]
        %v764 = vld [vmem:[#allocation2 + $0xb8] sm:$0xff]
        %v765 = vld [vmem:[#allocation2 + $0xc0] sm:$0xff]
        %v766 = vld [vmem:[#allocation2 + $0xc8] sm:$0xff]
        %v767 = vld [vmem:[#allocation2 + $0xd0] sm:$0xff]
        %v768 = vld [vmem:[#allocation2 + $0xd8] sm:$0xff]
        %v769 = vld [vmem:[#allocation2 + $0xe0] sm:$0xff]
        %v770 = vld [vmem:[#allocation2 + $0xe8] sm:$0xff]
        %v771 = vld [vmem:[#allocation2 + $0xf0] sm:$0xff]
        %v772 = vld [vmem:[#allocation2 + $0xf8] sm:$0xff]
        %v773 = vld [vmem:[%s249] sm:$0x1]
        %v775 = vlaneseq
        %v776 = vshrl.u32 %v775, 7
        %v777 = vsub.s32 0, %v776
        %v778 = vrot.slane %v773, %v777
        %v780 = vadd.f32 %v741, %v778
        %v781 = vadd.f32 %v742, %v778
        %v782 = vadd.f32 %v743, %v778
        %v783 = vadd.f32 %v744, %v778
        %v784 = vadd.f32 %v745, %v778
        %v785 = vadd.f32 %v746, %v778
        %v786 = vadd.f32 %v747, %v778
        %v787 = vadd.f32 %v748, %v778
        %v788 = vadd.f32 %v749, %v778
        %v789 = vadd.f32 %v750, %v778
        %v790 = vadd.f32 %v751, %v778
        %v791 = vadd.f32 %v752, %v778
        %v792 = vadd.f32 %v753, %v778
        %v793 = vadd.f32 %v754, %v778
        %v794 = vadd.f32 %v755, %v778
        %v795 = vadd.f32 %v756, %v778
        %v796 = vadd.f32 %v757, %v778
        %v797 = vadd.f32 %v758, %v778
        %v798 = vadd.f32 %v759, %v778
        %v799 = vadd.f32 %v760, %v778
        %v800 = vadd.f32 %v761, %v778
        %v801 = vadd.f32 %v762, %v778
        %v802 = vadd.f32 %v763, %v778
        %v803 = vadd.f32 %v764, %v778
        %v804 = vadd.f32 %v765, %v778
        %v805 = vadd.f32 %v766, %v778
        %v806 = vadd.f32 %v767, %v778
        %v807 = vadd.f32 %v768, %v778
        %v808 = vadd.f32 %v769, %v778
        %v809 = vadd.f32 %v770, %v778
        %v810 = vadd.f32 %v771, %v778
        %v811 = vadd.f32 %v772, %v778
        %v812 = vmax.f32 %v780, 0.0
        %v813 = vmax.f32 %v781, 0.0
        %v814 = vmax.f32 %v782, 0.0
        %v815 = vmax.f32 %v783, 0.0
        %v816 = vmax.f32 %v784, 0.0
        %v817 = vmax.f32 %v785, 0.0
        %v818 = vmax.f32 %v786, 0.0
        %v819 = vmax.f32 %v787, 0.0
        %v820 = vmax.f32 %v788, 0.0
        %v821 = vmax.f32 %v789, 0.0
        %v822 = vmax.f32 %v790, 0.0
        %v823 = vmax.f32 %v791, 0.0
        %v824 = vmax.f32 %v792, 0.0
        %v825 = vmax.f32 %v793, 0.0
        %v826 = vmax.f32 %v794, 0.0
        %v827 = vmax.f32 %v795, 0.0
        %v828 = vmax.f32 %v796, 0.0
        %v829 = vmax.f32 %v797, 0.0
        %v830 = vmax.f32 %v798, 0.0
        %v831 = vmax.f32 %v799, 0.0
        %v832 = vmax.f32 %v800, 0.0
        %v833 = vmax.f32 %v801, 0.0
        %v834 = vmax.f32 %v802, 0.0
        %v835 = vmax.f32 %v803, 0.0
        %v836 = vmax.f32 %v804, 0.0
        %v837 = vmax.f32 %v805, 0.0
        %v838 = vmax.f32 %v806, 0.0
        %v839 = vmax.f32 %v807, 0.0
        %v840 = vmax.f32 %v808, 0.0
        %v841 = vmax.f32 %v809, 0.0
        %v842 = vmax.f32 %v810, 0.0
        %v843 = vmax.f32 %v811, 0.0
        %v844 = vmin.f32 %v812, 6.0
        %v845 = vmin.f32 %v813, 6.0
        %v846 = vmin.f32 %v814, 6.0
        %v847 = vmin.f32 %v815, 6.0
        %v848 = vmin.f32 %v816, 6.0
        %v849 = vmin.f32 %v817, 6.0
        %v850 = vmin.f32 %v818, 6.0
        %v851 = vmin.f32 %v819, 6.0
        %v852 = vmin.f32 %v820, 6.0
        %v853 = vmin.f32 %v821, 6.0
        %v854 = vmin.f32 %v822, 6.0
        %v855 = vmin.f32 %v823, 6.0
        %v856 = vmin.f32 %v824, 6.0
        %v857 = vmin.f32 %v825, 6.0
        %v858 = vmin.f32 %v826, 6.0
        %v859 = vmin.f32 %v827, 6.0
        %v860 = vmin.f32 %v828, 6.0
        %v861 = vmin.f32 %v829, 6.0
        %v862 = vmin.f32 %v830, 6.0
        %v863 = vmin.f32 %v831, 6.0
        %v864 = vmin.f32 %v832, 6.0
        %v865 = vmin.f32 %v833, 6.0
        %v866 = vmin.f32 %v834, 6.0
        %v867 = vmin.f32 %v835, 6.0
        %v868 = vmin.f32 %v836, 6.0
        %v869 = vmin.f32 %v837, 6.0
        %v870 = vmin.f32 %v838, 6.0
        %v871 = vmin.f32 %v839, 6.0
        %v872 = vmin.f32 %v840, 6.0
        %v873 = vmin.f32 %v841, 6.0
        %v874 = vmin.f32 %v842, 6.0
        %v875 = vmin.f32 %v843, 6.0
        %v876 = vpack.c.bf16 %v845, %v844
        %v877 = vpack.c.bf16 %v847, %v846
        %v878 = vpack.c.bf16 %v849, %v848
        %v879 = vpack.c.bf16 %v851, %v850
        %v880 = vpack.c.bf16 %v853, %v852
        %v881 = vpack.c.bf16 %v855, %v854
        %v882 = vpack.c.bf16 %v857, %v856
        %v883 = vpack.c.bf16 %v859, %v858
        %v884 = vpack.c.bf16 %v861, %v860
        %v885 = vpack.c.bf16 %v863, %v862
        %v886 = vpack.c.bf16 %v865, %v864
        %v887 = vpack.c.bf16 %v867, %v866
        %v888 = vpack.c.bf16 %v869, %v868
        %v889 = vpack.c.bf16 %v871, %v870
        %v890 = vpack.c.bf16 %v873, %v872
        %v891 = vpack.c.bf16 %v875, %v874
        %v908 = vunpack.c.l.b16 %v876
        %v909 = vunpack.c.h.b16 %v876
        %v910 = vunpack.c.l.b16 %v877
        %v911 = vunpack.c.h.b16 %v877
        %v912 = vunpack.c.l.b16 %v878
        %v913 = vunpack.c.h.b16 %v878
        %v914 = vunpack.c.l.b16 %v879
        %v915 = vunpack.c.h.b16 %v879
        %v916 = vunpack.c.l.b16 %v880
        %v917 = vunpack.c.h.b16 %v880
        %v918 = vunpack.c.l.b16 %v881
        %v919 = vunpack.c.h.b16 %v881
        %v920 = vunpack.c.l.b16 %v882
        %v921 = vunpack.c.h.b16 %v882
        %v922 = vunpack.c.l.b16 %v883
        %v923 = vunpack.c.h.b16 %v883
        %v924 = vunpack.c.l.b16 %v884
        %v925 = vunpack.c.h.b16 %v884
        %v926 = vunpack.c.l.b16 %v885
        %v927 = vunpack.c.h.b16 %v885
        %v928 = vunpack.c.l.b16 %v886
        %v929 = vunpack.c.h.b16 %v886
        %v930 = vunpack.c.l.b16 %v887
        %v931 = vunpack.c.h.b16 %v887
        %v932 = vunpack.c.l.b16 %v888
        %v933 = vunpack.c.h.b16 %v888
        %v934 = vunpack.c.l.b16 %v889
        %v935 = vunpack.c.h.b16 %v889
        %v936 = vunpack.c.l.b16 %v890
        %v937 = vunpack.c.h.b16 %v890
        %v938 = vunpack.c.l.b16 %v891
        %v939 = vunpack.c.h.b16 %v891
        %v940 = vpack.c.b16 %v908, %v908
        %v941 = vpack.c.b16 %v909, %v909
        %v942 = vpack.c.b16 %v910, %v910
        %v943 = vpack.c.b16 %v911, %v911
        %v944 = vpack.c.b16 %v912, %v912
        %v945 = vpack.c.b16 %v913, %v913
        %v946 = vpack.c.b16 %v914, %v914
        %v947 = vpack.c.b16 %v915, %v915
        %v948 = vpack.c.b16 %v916, %v916
        %v949 = vpack.c.b16 %v917, %v917
        %v950 = vpack.c.b16 %v918, %v918
        %v951 = vpack.c.b16 %v919, %v919
        %v952 = vpack.c.b16 %v920, %v920
        %v953 = vpack.c.b16 %v921, %v921
        %v954 = vpack.c.b16 %v922, %v922
        %v955 = vpack.c.b16 %v923, %v923
        %v956 = vpack.c.b16 %v924, %v924
        %v957 = vpack.c.b16 %v925, %v925
        %v958 = vpack.c.b16 %v926, %v926
        %v959 = vpack.c.b16 %v927, %v927
        %v960 = vpack.c.b16 %v928, %v928
        %v961 = vpack.c.b16 %v929, %v929
        %v962 = vpack.c.b16 %v930, %v930
        %v963 = vpack.c.b16 %v931, %v931
        %v964 = vpack.c.b16 %v932, %v932
        %v965 = vpack.c.b16 %v933, %v933
        %v966 = vpack.c.b16 %v934, %v934
        %v967 = vpack.c.b16 %v935, %v935
        %v968 = vpack.c.b16 %v936, %v936
        %v969 = vpack.c.b16 %v937, %v937
        %v970 = vpack.c.b16 %v938, %v938
        %v971 = vpack.c.b16 %v939, %v939
        %1004 = vst [vmem:[%s257] sm:$0xf] %v940
        %1005 = vst [vmem:[%s257 + $0x4] sm:$0xf] %v941
        %1006 = vst [vmem:[%s257 + $0x8] sm:$0xf] %v942
        %1007 = vst [vmem:[%s257 + $0xc] sm:$0xf] %v943
        %1008 = vst [vmem:[%s257 + $0x10] sm:$0xf] %v944
        %1009 = vst [vmem:[%s257 + $0x14] sm:$0xf] %v945
        %1010 = vst [vmem:[%s257 + $0x18] sm:$0xf] %v946
        %1011 = vst [vmem:[%s257 + $0x1c] sm:$0xf] %v947
        %1012 = vst [vmem:[%s257 + $0x20] sm:$0xf] %v948
        %1013 = vst [vmem:[%s257 + $0x24] sm:$0xf] %v949
        %1014 = vst [vmem:[%s257 + $0x28] sm:$0xf] %v950
        %1015 = vst [vmem:[%s257 + $0x2c] sm:$0xf] %v951
        %1016 = vst [vmem:[%s257 + $0x30] sm:$0xf] %v952
        %1017 = vst [vmem:[%s257 + $0x34] sm:$0xf] %v953
        %1018 = vst [vmem:[%s257 + $0x38] sm:$0xf] %v954
        %1019 = vst [vmem:[%s257 + $0x3c] sm:$0xf] %v955
        %1020 = vst [vmem:[%s257 + $0x40] sm:$0xf] %v956
        %1021 = vst [vmem:[%s257 + $0x44] sm:$0xf] %v957
        %1022 = vst [vmem:[%s257 + $0x48] sm:$0xf] %v958
        %1023 = vst [vmem:[%s257 + $0x4c] sm:$0xf] %v959
        %1024 = vst [vmem:[%s257 + $0x50] sm:$0xf] %v960
        %1025 = vst [vmem:[%s257 + $0x54] sm:$0xf] %v961
        %1026 = vst [vmem:[%s257 + $0x58] sm:$0xf] %v962
        %1027 = vst [vmem:[%s257 + $0x5c] sm:$0xf] %v963
        %1028 = vst [vmem:[%s257 + $0x60] sm:$0xf] %v964
        %1029 = vst [vmem:[%s257 + $0x64] sm:$0xf] %v965
        %1030 = vst [vmem:[%s257 + $0x68] sm:$0xf] %v966
        %1031 = vst [vmem:[%s257 + $0x6c] sm:$0xf] %v967
        %1032 = vst [vmem:[%s257 + $0x70] sm:$0xf] %v968
        %1033 = vst [vmem:[%s257 + $0x74] sm:$0xf] %v969
        %1034 = vst [vmem:[%s257 + $0x78] sm:$0xf] %v970
        %1035 = vst [vmem:[%s257 + $0x7c] sm:$0xf] %v971
      $region40: #{conv_bn_relu6.1} parent=31 // pred_fallthru
        _
      %s1036 = smul.u32 32, %s19
      %p1037 = scmp.lt.s32.totalorder %s1036, 63
      %s1038 = scalar_select %p1037, %s1036, 63
      %p1039 = scmp.lt.s32.totalorder %s20, 0
      %s1040 = scalar_select %p1039, %s20, 0
      %s1041 = sadd.s32 %s1040, %s1038
      %s1042 = smul.addr %s1041, 4
      %s1043 = scalar_lea.vmem %s3, %s1042
      // Predicated region
      $region41: #{conv_bn_relu6.1} parent=31 // pred_check
        %p1044 = pneg %p135
      $region42: #{conv_bn_relu6.1} parent=31 // pred_check_branch
        %1046 = sbr.rel (%p1044) target = $region44
      $region43: #{conv_bn_relu6.1} parent=31 // pred_region
        %s1047 = smul.u32 32, %s19
      $region44: #{conv_bn_relu6.1} parent=31 // pred_fallthru
        _
    $region32: #{conv_bn_relu6.1} parent=5 // pred_fallthru
      _
    %p1048 = scmp.le.s32.totalorder 2, %s9
    // Predicated region
    $region45: #{conv_bn_relu6.1} parent=5 // pred_check
      %p1049 = pneg %p1048
    $region46: #{conv_bn_relu6.1} parent=5 // pred_check_branch
      %1051 = sbr.rel (%p1049) target = $region48
    $region47: #{conv_bn_relu6.1} parent=5 // pred_region
      %s1052 = ssub.s32 %s9, 2
      // Predicated region
      $region49: #{conv_bn_relu6.1} parent=47 // pred_check
        %p1053 = pneg %p141
      $region50: #{conv_bn_relu6.1} parent=47 // pred_check_branch
        %1055 = sbr.rel (%p1053) target = $region52
      $region51: #{conv_bn_relu6.1} parent=47 // pred_region
        %s1056 = smul.u32 32, %s22
        %p1057 = scmp.lt.s32.totalorder %s1056, 63
        %s1058 = scalar_select %p1057, %s1056, 63
        %p1059 = scmp.lt.s32.totalorder %s23, 0
        %s1060 = scalar_select %p1059, %s23, 0
        %s1061 = sadd.s32 %s1060, %s1058
        %s1062 = smul.addr %s1061, 4
        %s1063 = scalar_lea.vmem %s3, %s1062
      $region52: #{conv_bn_relu6.1} parent=47 // pred_fallthru
        _
    $region48: #{conv_bn_relu6.1} parent=5 // pred_fallthru
      _
  $region6: #{conv_bn_relu6.1} parent=0 // loop_footer
    %s13 = sadd.s32 1, %s9
  $region7: #{conv_bn_relu6.1} parent=0 // loop_footer_branch
    %8 = sbr.rel target = $region3
  $region8: #{conv_bn_relu6.1} parent=0 // loop_exit
    _

</llo_original>
